<compile_context>
chip_gen: v5e
topology: v5e:2x2
jax: 0.10.0
libtpu: 0.0.40
codegen_flags: <defaults>
</compile_context>

<pallas_src>
import functools

import jax
import jax.numpy as jnp
from jax.experimental import pallas as pl
from jax.experimental.pallas import tpu as pltpu

LN_EPS = 1e-5  # torch.nn.LayerNorm default eps


def _encoder_kernel(nblocks, mxu_dtype, x_ref, *refs):
    """Chained (Linear -> LayerNorm -> ReLU) on a row-tile, fully in VMEM.

    refs layout: (w0_ref, [wrest_ref if nblocks > 1], bgb_ref, o_ref)
      w0_ref   : (info_dim, emb)            mxu_dtype
      wrest_ref: (nblocks-1, emb, emb)      mxu_dtype
      bgb_ref  : (nblocks, 3, emb)          f32   rows = (bias, gamma, beta)
      o_ref    : (row_tile, emb)            f32
    """
    o_ref = refs[-1]
    bgb_ref = refs[-2]
    w0_ref = refs[0]
    wrest_ref = refs[1] if nblocks > 1 else None

    h = x_ref[...].astype(jnp.float32)
    for blk in range(nblocks):
        w = w0_ref[...] if blk == 0 else wrest_ref[blk - 1]
        # Linear on the MXU: bf16 x bf16 -> f32 accumulate.
        h = jnp.dot(h.astype(mxu_dtype), w, preferred_element_type=jnp.float32)

        p = bgb_ref[blk].astype(jnp.float32)        # (3, emb)
        b, g, beta = p[0:1, :], p[1:2, :], p[2:3, :]
        h = h + b

        # LayerNorm over the feature (lane) axis — fused single-pass statistics.
        n = h.shape[-1]
        inv_n = 1.0 / float(n)
        s1 = jnp.sum(h, axis=-1, keepdims=True)
        s2 = jnp.sum(h * h, axis=-1, keepdims=True)
        mean = s1 * inv_n
        var = jnp.maximum(s2 * inv_n - mean * mean, 0.0)
        # NOTE: zero-padded rows give var ~= 0; +eps keeps rsqrt finite and the
        #       padded rows are sliced away in the wrapper.
        h = (h - mean) * jax.lax.rsqrt(var + LN_EPS)
        h = h * g + beta
        # ReLU (VPU)
        h = jnp.maximum(h, 0.0)

    o_ref[...] = h.astype(o_ref.dtype)


def _choose_row_tile(m, target=1024):
    """Pick a sublane-aligned row tile big enough to amortize per-step overhead."""
    if m <= target:
        return max(8, ((m + 7) // 8) * 8)
    return target


def vehicles_state_encoder(x, params, *, row_tile=None, mxu_dtype=jnp.bfloat16):
    """x: (batch, num_vehicles, info_dim) float32.
    params: list of (W, b, gamma, beta) per block; W: (d_in, d_out),
    b/gamma/beta: (1, d_out).  Returns (batch, num_vehicles, emb_dim)."""
    batch, num_vehicles, info_dim = x.shape
    nblocks = len(params)
    emb = params[0][0].shape[1]

    m = batch * num_vehicles
    if row_tile is None:
        row_tile = _choose_row_tile(m)
    row_tile = max(8, (row_tile // 8) * 8)
    m_pad = ((m + row_tile - 1) // row_tile) * row_tile

    x2 = x.reshape(m, info_dim)
    if m_pad != m:
        x2 = jnp.pad(x2, ((0, m_pad - m), (0, 0)))

    # Pack parameters into few, constant-indexed inputs.
    w0 = params[0][0].astype(mxu_dtype)                                   # (info_dim, emb)
    bgb = jnp.stack(
        [jnp.concatenate([b, g, be], axis=0) for (_, b, g, be) in params]
    ).astype(jnp.float32)                                                 # (nblocks, 3, emb)

    inputs = [x2, w0]
    in_specs = [
        pl.BlockSpec((row_tile, info_dim), lambda i: (i, 0)),
        pl.BlockSpec((info_dim, emb), lambda i: (0, 0)),
    ]
    if nblocks > 1:
        wrest = jnp.stack([w for (w, _, _, _) in params[1:]]).astype(mxu_dtype)
        inputs.append(wrest)                                              # (nblocks-1, emb, emb)
        in_specs.append(pl.BlockSpec((nblocks - 1, emb, emb), lambda i: (0, 0, 0)))
    inputs.append(bgb)
    in_specs.append(pl.BlockSpec((nblocks, 3, emb), lambda i: (0, 0, 0)))

    out = pl.pallas_call(
        functools.partial(_encoder_kernel, nblocks, mxu_dtype),
        out_shape=jax.ShapeDtypeStruct((m_pad, emb), x.dtype),
        grid_spec=pltpu.PrefetchScalarGridSpec(
            num_scalar_prefetch=0,
            grid=(m_pad // row_tile,),
            in_specs=in_specs,
            out_specs=pl.BlockSpec((row_tile, emb), lambda i: (i, 0)),
        ),
        compiler_params=pltpu.CompilerParams(
            dimension_semantics=("parallel",)),
    )(*inputs)

    return out[:m].reshape(batch, num_vehicles, emb)


def init_params(key, info_dim, emb_dim, nblocks):
    """Deterministic synthetic parameters mimicking the module's shapes."""
    params = []
    d_in = info_dim
    for _ in range(nblocks):
        key, kw, kb = jax.random.split(key, 3)
        bound = 1.0 / jnp.sqrt(d_in)
        w = jax.random.uniform(kw, (d_in, emb_dim), jnp.float32, -bound, bound)
        b = jax.random.uniform(kb, (1, emb_dim), jnp.float32, -bound, bound)
        gamma = jnp.ones((1, emb_dim), jnp.float32)
        beta = jnp.zeros((1, emb_dim), jnp.float32)
        params.append((w, b, gamma, beta))
        d_in = emb_dim
    return params


if __name__ == "__main__":
    # Small shapes consistent with the module.
    batch = 2
    num_vehicles = 8
    vehicles_state_information_dim = 4
    vehicles_state_embedding_dim = 32
    linear_blocks_number = 3

    key = jax.random.PRNGKey(0)
    key, kx = jax.random.split(key)
    vehicles_state_information = jax.random.normal(
        kx, (batch, num_vehicles, vehicles_state_information_dim), jnp.float32)

    params = init_params(key, vehicles_state_information_dim,
                         vehicles_state_embedding_dim, linear_blocks_number)

    hidden = vehicles_state_encoder(vehicles_state_information, params)
    jax.block_until_ready(hidden)

    # Reference in plain JAX, mirroring the kernel's bf16-MXU / f32-LayerNorm math.
    h_ref = vehicles_state_information.reshape(
        -1, vehicles_state_information_dim).astype(jnp.float32)
    for (w, b, g, be) in params:
        h_ref = jnp.dot(h_ref.astype(jnp.bfloat16), w.astype(jnp.bfloat16),
                        preferred_element_type=jnp.float32) + b
        mu = h_ref.mean(-1, keepdims=True)
        var = ((h_ref - mu) ** 2).mean(-1, keepdims=True)
        h_ref = (h_ref - mu) / jnp.sqrt(var + LN_EPS) * g + be
        h_ref = jnp.maximum(h_ref, 0.0)
    h_ref = h_ref.reshape(batch, num_vehicles, vehicles_state_embedding_dim)

    # bf16 rounding on the MXU path can differ by ~1 bf16 ulp between the kernel
    # and the XLA reference; 1e-2 still catches any layout / math error.
    assert jnp.allclose(hidden, h_ref, atol=1e-2, rtol=1e-2), (
        float(jnp.max(jnp.abs(hidden - h_ref))))

    print("KERNEL_OK")
</pallas_src>

<mosaic_0001>
module attributes {stable_mosaic.version = 11 : i64} {
  func.func @_encoder_kernel(%arg0: i32, %arg1: memref<16x4xf32, #tpu.memory_space<vmem>>, %arg2: memref<4x32xbf16, #tpu.memory_space<vmem>>, %arg3: memref<2x32x32xbf16, #tpu.memory_space<vmem>>, %arg4: memref<3x3x32xf32, #tpu.memory_space<vmem>>, %arg5: memref<16x32xf32, #tpu.memory_space<vmem>>) attributes {dimension_semantics = [#tpu.dimension_semantics<parallel>], iteration_bounds = array<i64: 1>, scalar_prefetch = 0 : i64, scratch_operands = 0 : i64, tpu.core_type = #tpu.core_type<tc>, window_params = [{transform_indices = @transform_0, window_bounds = array<i64: 16, 4>}, {pipeline_mode = #tpu.pipeline_mode<synchronous>, transform_indices = @transform_1, window_bounds = array<i64: 4, 32>}, {pipeline_mode = #tpu.pipeline_mode<synchronous>, transform_indices = @transform_2, window_bounds = array<i64: 2, 32, 32>}, {pipeline_mode = #tpu.pipeline_mode<synchronous>, transform_indices = @transform_3, window_bounds = array<i64: 3, 3, 32>}, {transform_indices = @transform_4, window_bounds = array<i64: 16, 32>}]} {
    %c0 = arith.constant 0 : index
    %c0_0 = arith.constant 0 : index
    %0 = vector.load %arg1[%c0, %c0_0] : memref<16x4xf32, #tpu.memory_space<vmem>>, vector<16x4xf32>
    %c0_1 = arith.constant 0 : index
    %c0_2 = arith.constant 0 : index
    %1 = vector.load %arg2[%c0_1, %c0_2] : memref<4x32xbf16, #tpu.memory_space<vmem>>, vector<4x32xbf16>
    %2 = arith.truncf %0 : vector<16x4xf32> to vector<16x4xbf16>
    %cst = arith.constant dense<0.000000e+00> : vector<16x32xf32>
    %3 = tpu.matmul %2, %1, %cst {dimension_numbers = #tpu.dot_dimension_numbers<[1], [0], [0], [1], [0, 0, 1, 1], [], []>} : vector<16x4xbf16>, vector<4x32xbf16>, vector<16x32xf32> -> vector<16x32xf32>
    %c0_3 = arith.constant 0 : index
    %c0_4 = arith.constant 0 : index
    %c0_5 = arith.constant 0 : index
    %4 = vector.load %arg4[%c0_3, %c0_4, %c0_5] : memref<3x3x32xf32, #tpu.memory_space<vmem>>, vector<1x3x32xf32>
    %5 = vector.shape_cast %4 : vector<1x3x32xf32> to vector<3x32xf32>
    %6 = vector.extract_strided_slice %5 {offsets = [0, 0], sizes = [1, 32], strides = [1, 1]} : vector<3x32xf32> to vector<1x32xf32>
    %7 = vector.extract_strided_slice %5 {offsets = [1, 0], sizes = [1, 32], strides = [1, 1]} : vector<3x32xf32> to vector<1x32xf32>
    %8 = vector.extract_strided_slice %5 {offsets = [2, 0], sizes = [1, 32], strides = [1, 1]} : vector<3x32xf32> to vector<1x32xf32>
    %9 = vector.broadcast %6 : vector<1x32xf32> to vector<16x32xf32>
    %10 = arith.addf %3, %9 : vector<16x32xf32>
    %cst_6 = arith.constant dense<0.000000e+00> : vector<16xf32>
    %11 = vector.multi_reduction <add>, %10, %cst_6 [1] : vector<16x32xf32> to vector<16xf32>
    %12 = vector.shape_cast %11 : vector<16xf32> to vector<16x1xf32>
    %13 = arith.mulf %10, %10 : vector<16x32xf32>
    %cst_7 = arith.constant dense<0.000000e+00> : vector<16xf32>
    %14 = vector.multi_reduction <add>, %13, %cst_7 [1] : vector<16x32xf32> to vector<16xf32>
    %15 = vector.shape_cast %14 : vector<16xf32> to vector<16x1xf32>
    %cst_8 = arith.constant 3.125000e-02 : f32
    %16 = vector.broadcast %cst_8 : f32 to vector<16x1xf32>
    %17 = arith.mulf %12, %16 : vector<16x1xf32>
    %cst_9 = arith.constant 3.125000e-02 : f32
    %18 = vector.broadcast %cst_9 : f32 to vector<16x1xf32>
    %19 = arith.mulf %15, %18 : vector<16x1xf32>
    %20 = arith.mulf %17, %17 : vector<16x1xf32>
    %21 = arith.subf %19, %20 : vector<16x1xf32>
    %cst_10 = arith.constant 0.000000e+00 : f32
    %22 = vector.broadcast %cst_10 : f32 to vector<16x1xf32>
    %23 = arith.maximumf %21, %22 : vector<16x1xf32>
    %24 = vector.broadcast %17 : vector<16x1xf32> to vector<16x32xf32>
    %25 = arith.subf %10, %24 : vector<16x32xf32>
    %cst_11 = arith.constant 9.99999974E-6 : f32
    %26 = vector.broadcast %cst_11 : f32 to vector<16x1xf32>
    %27 = arith.addf %23, %26 : vector<16x1xf32>
    %28 = math.rsqrt %27 : vector<16x1xf32>
    %29 = vector.broadcast %28 : vector<16x1xf32> to vector<16x32xf32>
    %30 = arith.mulf %25, %29 : vector<16x32xf32>
    %31 = vector.broadcast %7 : vector<1x32xf32> to vector<16x32xf32>
    %32 = arith.mulf %30, %31 : vector<16x32xf32>
    %33 = vector.broadcast %8 : vector<1x32xf32> to vector<16x32xf32>
    %34 = arith.addf %32, %33 : vector<16x32xf32>
    %cst_12 = arith.constant 0.000000e+00 : f32
    %35 = vector.broadcast %cst_12 : f32 to vector<16x32xf32>
    %36 = arith.maximumf %34, %35 : vector<16x32xf32>
    %c0_13 = arith.constant 0 : index
    %c0_14 = arith.constant 0 : index
    %c0_15 = arith.constant 0 : index
    %37 = vector.load %arg3[%c0_13, %c0_14, %c0_15] : memref<2x32x32xbf16, #tpu.memory_space<vmem>>, vector<1x32x32xbf16>
    %38 = vector.shape_cast %37 : vector<1x32x32xbf16> to vector<32x32xbf16>
    %39 = arith.truncf %36 : vector<16x32xf32> to vector<16x32xbf16>
    %cst_16 = arith.constant dense<0.000000e+00> : vector<16x32xf32>
    %40 = tpu.matmul %39, %38, %cst_16 {dimension_numbers = #tpu.dot_dimension_numbers<[1], [0], [0], [1], [0, 0, 1, 1], [], []>} : vector<16x32xbf16>, vector<32x32xbf16>, vector<16x32xf32> -> vector<16x32xf32>
    %c1 = arith.constant 1 : index
    %c0_17 = arith.constant 0 : index
    %c0_18 = arith.constant 0 : index
    %41 = vector.load %arg4[%c1, %c0_17, %c0_18] : memref<3x3x32xf32, #tpu.memory_space<vmem>>, vector<1x3x32xf32>
    %42 = vector.shape_cast %41 : vector<1x3x32xf32> to vector<3x32xf32>
    %43 = vector.extract_strided_slice %42 {offsets = [0, 0], sizes = [1, 32], strides = [1, 1]} : vector<3x32xf32> to vector<1x32xf32>
    %44 = vector.extract_strided_slice %42 {offsets = [1, 0], sizes = [1, 32], strides = [1, 1]} : vector<3x32xf32> to vector<1x32xf32>
    %45 = vector.extract_strided_slice %42 {offsets = [2, 0], sizes = [1, 32], strides = [1, 1]} : vector<3x32xf32> to vector<1x32xf32>
    %46 = vector.broadcast %43 : vector<1x32xf32> to vector<16x32xf32>
    %47 = arith.addf %40, %46 : vector<16x32xf32>
    %cst_19 = arith.constant dense<0.000000e+00> : vector<16xf32>
    %48 = vector.multi_reduction <add>, %47, %cst_19 [1] : vector<16x32xf32> to vector<16xf32>
    %49 = vector.shape_cast %48 : vector<16xf32> to vector<16x1xf32>
    %50 = arith.mulf %47, %47 : vector<16x32xf32>
    %cst_20 = arith.constant dense<0.000000e+00> : vector<16xf32>
    %51 = vector.multi_reduction <add>, %50, %cst_20 [1] : vector<16x32xf32> to vector<16xf32>
    %52 = vector.shape_cast %51 : vector<16xf32> to vector<16x1xf32>
    %cst_21 = arith.constant 3.125000e-02 : f32
    %53 = vector.broadcast %cst_21 : f32 to vector<16x1xf32>
    %54 = arith.mulf %49, %53 : vector<16x1xf32>
    %cst_22 = arith.constant 3.125000e-02 : f32
    %55 = vector.broadcast %cst_22 : f32 to vector<16x1xf32>
    %56 = arith.mulf %52, %55 : vector<16x1xf32>
    %57 = arith.mulf %54, %54 : vector<16x1xf32>
    %58 = arith.subf %56, %57 : vector<16x1xf32>
    %cst_23 = arith.constant 0.000000e+00 : f32
    %59 = vector.broadcast %cst_23 : f32 to vector<16x1xf32>
    %60 = arith.maximumf %58, %59 : vector<16x1xf32>
    %61 = vector.broadcast %54 : vector<16x1xf32> to vector<16x32xf32>
    %62 = arith.subf %47, %61 : vector<16x32xf32>
    %cst_24 = arith.constant 9.99999974E-6 : f32
    %63 = vector.broadcast %cst_24 : f32 to vector<16x1xf32>
    %64 = arith.addf %60, %63 : vector<16x1xf32>
    %65 = math.rsqrt %64 : vector<16x1xf32>
    %66 = vector.broadcast %65 : vector<16x1xf32> to vector<16x32xf32>
    %67 = arith.mulf %62, %66 : vector<16x32xf32>
    %68 = vector.broadcast %44 : vector<1x32xf32> to vector<16x32xf32>
    %69 = arith.mulf %67, %68 : vector<16x32xf32>
    %70 = vector.broadcast %45 : vector<1x32xf32> to vector<16x32xf32>
    %71 = arith.addf %69, %70 : vector<16x32xf32>
    %cst_25 = arith.constant 0.000000e+00 : f32
    %72 = vector.broadcast %cst_25 : f32 to vector<16x32xf32>
    %73 = arith.maximumf %71, %72 : vector<16x32xf32>
    %c1_26 = arith.constant 1 : index
    %c0_27 = arith.constant 0 : index
    %c0_28 = arith.constant 0 : index
    %74 = vector.load %arg3[%c1_26, %c0_27, %c0_28] : memref<2x32x32xbf16, #tpu.memory_space<vmem>>, vector<1x32x32xbf16>
    %75 = vector.shape_cast %74 : vector<1x32x32xbf16> to vector<32x32xbf16>
    %76 = arith.truncf %73 : vector<16x32xf32> to vector<16x32xbf16>
    %cst_29 = arith.constant dense<0.000000e+00> : vector<16x32xf32>
    %77 = tpu.matmul %76, %75, %cst_29 {dimension_numbers = #tpu.dot_dimension_numbers<[1], [0], [0], [1], [0, 0, 1, 1], [], []>} : vector<16x32xbf16>, vector<32x32xbf16>, vector<16x32xf32> -> vector<16x32xf32>
    %c2 = arith.constant 2 : index
    %c0_30 = arith.constant 0 : index
    %c0_31 = arith.constant 0 : index
    %78 = vector.load %arg4[%c2, %c0_30, %c0_31] : memref<3x3x32xf32, #tpu.memory_space<vmem>>, vector<1x3x32xf32>
    %79 = vector.shape_cast %78 : vector<1x3x32xf32> to vector<3x32xf32>
    %80 = vector.extract_strided_slice %79 {offsets = [0, 0], sizes = [1, 32], strides = [1, 1]} : vector<3x32xf32> to vector<1x32xf32>
    %81 = vector.extract_strided_slice %79 {offsets = [1, 0], sizes = [1, 32], strides = [1, 1]} : vector<3x32xf32> to vector<1x32xf32>
    %82 = vector.extract_strided_slice %79 {offsets = [2, 0], sizes = [1, 32], strides = [1, 1]} : vector<3x32xf32> to vector<1x32xf32>
    %83 = vector.broadcast %80 : vector<1x32xf32> to vector<16x32xf32>
    %84 = arith.addf %77, %83 : vector<16x32xf32>
    %cst_32 = arith.constant dense<0.000000e+00> : vector<16xf32>
    %85 = vector.multi_reduction <add>, %84, %cst_32 [1] : vector<16x32xf32> to vector<16xf32>
    %86 = vector.shape_cast %85 : vector<16xf32> to vector<16x1xf32>
    %87 = arith.mulf %84, %84 : vector<16x32xf32>
    %cst_33 = arith.constant dense<0.000000e+00> : vector<16xf32>
    %88 = vector.multi_reduction <add>, %87, %cst_33 [1] : vector<16x32xf32> to vector<16xf32>
    %89 = vector.shape_cast %88 : vector<16xf32> to vector<16x1xf32>
    %cst_34 = arith.constant 3.125000e-02 : f32
    %90 = vector.broadcast %cst_34 : f32 to vector<16x1xf32>
    %91 = arith.mulf %86, %90 : vector<16x1xf32>
    %cst_35 = arith.constant 3.125000e-02 : f32
    %92 = vector.broadcast %cst_35 : f32 to vector<16x1xf32>
    %93 = arith.mulf %89, %92 : vector<16x1xf32>
    %94 = arith.mulf %91, %91 : vector<16x1xf32>
    %95 = arith.subf %93, %94 : vector<16x1xf32>
    %cst_36 = arith.constant 0.000000e+00 : f32
    %96 = vector.broadcast %cst_36 : f32 to vector<16x1xf32>
    %97 = arith.maximumf %95, %96 : vector<16x1xf32>
    %98 = vector.broadcast %91 : vector<16x1xf32> to vector<16x32xf32>
    %99 = arith.subf %84, %98 : vector<16x32xf32>
    %cst_37 = arith.constant 9.99999974E-6 : f32
    %100 = vector.broadcast %cst_37 : f32 to vector<16x1xf32>
    %101 = arith.addf %97, %100 : vector<16x1xf32>
    %102 = math.rsqrt %101 : vector<16x1xf32>
    %103 = vector.broadcast %102 : vector<16x1xf32> to vector<16x32xf32>
    %104 = arith.mulf %99, %103 : vector<16x32xf32>
    %105 = vector.broadcast %81 : vector<1x32xf32> to vector<16x32xf32>
    %106 = arith.mulf %104, %105 : vector<16x32xf32>
    %107 = vector.broadcast %82 : vector<1x32xf32> to vector<16x32xf32>
    %108 = arith.addf %106, %107 : vector<16x32xf32>
    %cst_38 = arith.constant 0.000000e+00 : f32
    %109 = vector.broadcast %cst_38 : f32 to vector<16x32xf32>
    %110 = arith.maximumf %108, %109 : vector<16x32xf32>
    %c0_39 = arith.constant 0 : index
    %c0_40 = arith.constant 0 : index
    %111 = vector.load %arg5[%c0_39, %c0_40] : memref<16x32xf32, #tpu.memory_space<vmem>>, vector<16x32xf32>
    tpu.vector_store %arg5[%c0_39, %c0_40], %110 {strides = array<i32>} : memref<16x32xf32, #tpu.memory_space<vmem>>, vector<16x32xf32>,
    return
  }
  func.func @transform_0(%arg0: i32) -> (i32, i32) {
    %c0_i32 = arith.constant 0 : i32
    %c0_i32_0 = arith.constant 0 : i32
    return %arg0, %c0_i32 : i32, i32
  }
  func.func @transform_1(%arg0: i32) -> (i32, i32) {
    %c0_i32 = arith.constant 0 : i32
    %c0_i32_0 = arith.constant 0 : i32
    %c0_i32_1 = arith.constant 0 : i32
    return %c0_i32, %c0_i32_0 : i32, i32
  }
  func.func @transform_2(%arg0: i32) -> (i32, i32, i32) {
    %c0_i32 = arith.constant 0 : i32
    %c0_i32_0 = arith.constant 0 : i32
    %c0_i32_1 = arith.constant 0 : i32
    %c0_i32_2 = arith.constant 0 : i32
    return %c0_i32, %c0_i32_0, %c0_i32_1 : i32, i32, i32
  }
  func.func @transform_3(%arg0: i32) -> (i32, i32, i32) {
    %c0_i32 = arith.constant 0 : i32
    %c0_i32_0 = arith.constant 0 : i32
    %c0_i32_1 = arith.constant 0 : i32
    %c0_i32_2 = arith.constant 0 : i32
    return %c0_i32, %c0_i32_0, %c0_i32_1 : i32, i32, i32
  }
  func.func @transform_4(%arg0: i32) -> (i32, i32) {
    %c0_i32 = arith.constant 0 : i32
    %c0_i32_0 = arith.constant 0 : i32
    return %arg0, %c0_i32 : i32, i32
  }
}

</mosaic_0001>

<llo_original>
// kernel: tpu_custom_call.1
$region0: #{tpu_custom_call.1}
  #allocation0 [shape = 'u32[]', space=smem, size = 0x4, offset = 0x4, fixed_abs, tag = 'smem constant byte address 0x4 - core index']
  #allocation1 [shape = 'u32[72,128]{1,0:T(1,128)}', space=vmem, size = 0x9000, scoped, tag = 'internal scratch']
  %s0 = inlined_call_operand.vmem [shape: f32[16,4], index: 0, kind: input, shape index: {}]
  %s1 = inlined_call_operand.vmem [shape: bf16[4,32], index: 1, kind: input, shape index: {}]
  %s2 = inlined_call_operand.hbm [shape: bf16[2,32,32], index: 2, kind: input, shape index: {}]
  %s3 = inlined_call_operand.vmem [shape: f32[3,3,32], index: 3, kind: input, shape index: {}]
  %s4 = inlined_call_operand.hbm [shape: f32[16,32], index: 4, kind: output, shape index: {}]
  %s5 = sld [smem:[#allocation0]]
  $region30: #{tpu_custom_call.1} parent=0
    _
  %s7 = ssub.s32 1, %s5
  %s8 = scalar_select 0, %s7, %s5
  $region1: #{tpu_custom_call.1} parent=0
    #allocation2 [shape = 'u8[16384]{0}', space=vmem, size = 0x4000, scoped, tag = 'input window, operand 2, single buffered']
    #allocation3 [shape = 's32[1]{0}', space=sflag, size = 0x4, scoped, tag = 'scoped memory for tpu_custom_call.1']
    #allocation4 [shape = 's32[1]{0}', space=sflag, size = 0x4, scoped, tag = 'scoped memory for tpu_custom_call.1']
    #allocation5 [shape = 'u8[8192]{0}', space=vmem, size = 0x2000, scoped, tag = 'output window, operand 0, single buffered']
    %9 = vsyncpa [#allocation3], 0
    %10 = vsyncpa [#allocation4], 0
    // Predicated region
    $region2: #{tpu_custom_call.1} parent=1 // pred_check
      _
    $region3: #{tpu_custom_call.1} parent=1 // pred_check_branch
      %12 = sbr.rel (0) target = $region5
    $region4: #{tpu_custom_call.1} parent=1 // pred_region
      _
    $region5: #{tpu_custom_call.1} parent=1 // pred_fallthru
      _
    // Predicated region
    $region6: #{tpu_custom_call.1} parent=1 // pred_check
      _
    $region7: #{tpu_custom_call.1} parent=1 // pred_check_branch
      %14 = sbr.rel (0) target = $region9
    $region8: #{tpu_custom_call.1} parent=1 // pred_region
      _
    $region9: #{tpu_custom_call.1} parent=1 // pred_fallthru
      _
    // Predicated region
    $region10: #{tpu_custom_call.1} parent=1 // pred_check
      _
    $region11: #{tpu_custom_call.1} parent=1 // pred_check_branch
      %16 = sbr.rel (0) target = $region13
    $region12: #{tpu_custom_call.1} parent=1 // pred_region
      %18 = vsyncadd [#allocation3], 0
      %s19 = sshll.u32 %s2, 4
      %s20 = int_to_ptr.hbm [resolvable:$true] %s19
      %s21 = sshll.u32 [#allocation2], 4
      %s22 = int_to_ptr.vmem [resolvable:$true] %s21
      %27 = dma.hbm_to_vmem [thread:$0]  %s20, 512, %s22, [#allocation3], 64, 64, 4
    $region13: #{tpu_custom_call.1} parent=1 // pred_fallthru
      _
    // Predicated region
    $region14: #{tpu_custom_call.1} parent=1 // pred_check
      _
    $region15: #{tpu_custom_call.1} parent=1 // pred_check_branch
      %29 = sbr.rel (0) target = $region17
    $region16: #{tpu_custom_call.1} parent=1 // pred_region
      _
    $region17: #{tpu_custom_call.1} parent=1 // pred_fallthru
      _
    // Predicated region
    $region18: #{tpu_custom_call.1} parent=1 // pred_check
      _
    $region19: #{tpu_custom_call.1} parent=1 // pred_check_branch
      %31 = sbr.rel (0) target = $region21
    $region20: #{tpu_custom_call.1} parent=1 // pred_region
      %33 = dma.done [#allocation3], 512
    $region21: #{tpu_custom_call.1} parent=1 // pred_fallthru
      _
    %v35 = vld [vmem:[%s0] sm:$0xff]
    %v36 = vld [vmem:[%s0 + $0x8] sm:$0xff]
    %v37 = vld [vmem:[%s1] sm:$0x3]
    %v38 = vpack.c.bf16 %v36, %v35
    %v39 = vld [vmem:[%s3] sm:$0x7]
    %v40 = vperm.slane %v39, 0
    %vm41 = vcmask 31744
    %v43 = vsel %vm41, %v38, 0
    %vm45 = vcmask 1041408
    %v47 = vsel %vm45, %v37, 0
    %49 = vmatpush.bf16.msra.mxu0 0
    %50 = vmatpush.bf16.msra.mxu0 0
    %51 = vmatpush.bf16.msra.mxu0 0
    %52 = vmatpush.bf16.msra.mxu0 0
    %53 = vmatpush.bf16.msra.mxu0 0
    %54 = vmatpush.bf16.msra.mxu0 0
    %55 = vmatpush.bf16.msra.mxu0 0
    %56 = vmatpush.bf16.msra.mxu0 %v47
    %57 = vmatmul.bf16.gmra.mxu0 %v43
    %v58 = vpop.f32.mrf.mxu0
    %v59 = vadd.f32 %v40, %v58
    %v60 = vpop.f32.mrf.mxu0
    %v61 = vadd.f32 %v40, %v60
    %62 = vdwg.mxu0
    %vm63 = vcmask 261120
    %v64 = vsel %vm63, %v59, 0.0
    %65 = vadd.xlane.f32.xlu0 %v64
    %v66 = vpop.xlane.xlu0 %65
    %v67 = vsel %vm63, %v61, 0.0
    %68 = vadd.xlane.f32.xlu0 %v67
    %v69 = vpop.xlane.xlu0 %68
    %v70 = vmul.f32 %v59, %v59
    %v71 = vmul.f32 %v61, %v61
    %v72 = vsel %vm63, %v70, 0.0
    %73 = vadd.xlane.f32.xlu0 %v72
    %v74 = vpop.xlane.xlu0 %73
    %v75 = vsel %vm63, %v71, 0.0
    %76 = vadd.xlane.f32.xlu0 %v75
    %v77 = vpop.xlane.xlu0 %76
    %v78 = vmul.f32 %v66, 0.03125
    %v79 = vmul.f32 %v69, 0.03125
    %v80 = vmul.f32 %v74, 0.03125
    %v81 = vmul.f32 %v77, 0.03125
    %v82 = vmul.f32 %v78, %v78
    %v83 = vmul.f32 %v79, %v79
    %v84 = vsub.f32 %v80, %v82
    %v85 = vsub.f32 %v81, %v83
    %v86 = vmax.f32 %v84, 0.0
    %v87 = vmax.f32 %v85, 0.0
    %v88 = vsub.f32 %v59, %v78
    %v89 = vsub.f32 %v61, %v79
    %v90 = vadd.f32 %v86, 1e-05
    %v91 = vadd.f32 %v87, 1e-05
    %v92 = vrsqrt.pop %v90
    %v93 = vmul.f32 %v92, %v90
    %v94 = vmul.f32 %v93, %v92
    %v95 = vmul.f32 0.5, %v94
    %v96 = vsub.f32 1.5, %v95
    %v97 = vmul.f32 %v92, %v96
    %vm98 = vweird.f32 %v90
    %vm99 = vweird.f32 %v92
    %vm100 = vmor %vm98, %vm99
    %v101 = vsel %vm100, %v92, %v97
    %v102 = vrsqrt.pop %v91
    %v103 = vmul.f32 %v102, %v91
    %v104 = vmul.f32 %v103, %v102
    %v105 = vmul.f32 0.5, %v104
    %v106 = vsub.f32 1.5, %v105
    %v107 = vmul.f32 %v102, %v106
    %vm108 = vweird.f32 %v91
    %vm109 = vweird.f32 %v102
    %vm110 = vmor %vm108, %vm109
    %v111 = vsel %vm110, %v102, %v107
    %v112 = vmul.f32 %v88, %v101
    %v113 = vmul.f32 %v89, %v111
    %v114 = vperm.slane %v39, 1
    %v115 = vmul.f32 %v112, %v114
    %v116 = vmul.f32 %v113, %v114
    %v117 = vperm.slane %v39, 2
    %v118 = vadd.f32 %v115, %v117
    %v119 = vadd.f32 %v116, %v117
    %v120 = vmax.f32 %v118, 0.0
    %v121 = vmax.f32 %v119, 0.0
    %v122 = vld [vmem:[#allocation2] sm:$0xf]
    %v123 = vld [vmem:[#allocation2 + $0x4] sm:$0xf]
    %v124 = vld [vmem:[#allocation2 + $0x8] sm:$0xf]
    %v125 = vld [vmem:[#allocation2 + $0xc] sm:$0xf]
    %v126 = vpack.c.bf16 %v121, %v120
    %s127 = scalar_lea.vmem %s3, 4
    %v128 = vld [vmem:[%s127] sm:$0x7]
    %v129 = vperm.slane %v128, 0
    %v134 = vunpack.c.l.b16 %v122
    %v135 = vunpack.c.l.b16 %v123
    %v136 = vunpack.c.l.b16 %v124
    %v137 = vunpack.c.l.b16 %v125
    %v138 = vpack.c.b16 %v135, %v134
    %v139 = vpack.c.b16 %v137, %v136
    %v143 = vsel %vm63, %v126, 0
    %145 = vmatpush.bf16.msra.mxu0 0
    %146 = vmatpush.bf16.msra.mxu0 0
    %147 = vmatpush.bf16.msra.mxu0 0
    %148 = vmatpush.bf16.msra.mxu0 0
    %149 = vmatpush.bf16.msra.mxu0 0
    %150 = vmatpush.bf16.msra.mxu0 0
    %151 = vmatpush.bf16.msra.mxu0 %v139
    %152 = vmatpush.bf16.msra.mxu0 %v138
    %153 = vmatmul.bf16.gmra.mxu0 %v143
    %v154 = vpop.f32.mrf.mxu0
    %v155 = vadd.f32 %v129, %v154
    %v156 = vpop.f32.mrf.mxu0
    %v157 = vadd.f32 %v129, %v156
    %158 = vdwg.mxu0
    %v159 = vsel %vm63, %v155, 0.0
    %160 = vadd.xlane.f32.xlu0 %v159
    %v161 = vpop.xlane.xlu0 %160
    %v162 = vsel %vm63, %v157, 0.0
    %163 = vadd.xlane.f32.xlu0 %v162
    %v164 = vpop.xlane.xlu0 %163
    %v165 = vmul.f32 %v155, %v155
    %v166 = vmul.f32 %v157, %v157
    %v167 = vsel %vm63, %v165, 0.0
    %168 = vadd.xlane.f32.xlu0 %v167
    %v169 = vpop.xlane.xlu0 %168
    %v170 = vsel %vm63, %v166, 0.0
    %171 = vadd.xlane.f32.xlu0 %v170
    %v172 = vpop.xlane.xlu0 %171
    %v173 = vmul.f32 %v161, 0.03125
    %v174 = vmul.f32 %v164, 0.03125
    %v175 = vmul.f32 %v169, 0.03125
    %v176 = vmul.f32 %v172, 0.03125
    %v177 = vmul.f32 %v173, %v173
    %v178 = vmul.f32 %v174, %v174
    %v179 = vsub.f32 %v175, %v177
    %v180 = vsub.f32 %v176, %v178
    %v181 = vmax.f32 %v179, 0.0
    %v182 = vmax.f32 %v180, 0.0
    %v183 = vsub.f32 %v155, %v173
    %v184 = vsub.f32 %v157, %v174
    %v185 = vadd.f32 %v181, 1e-05
    %v186 = vadd.f32 %v182, 1e-05
    %v187 = vrsqrt.pop %v185
    %v188 = vmul.f32 %v187, %v185
    %v189 = vmul.f32 %v188, %v187
    %v190 = vmul.f32 0.5, %v189
    %v191 = vsub.f32 1.5, %v190
    %v192 = vmul.f32 %v187, %v191
    %vm193 = vweird.f32 %v185
    %vm194 = vweird.f32 %v187
    %vm195 = vmor %vm193, %vm194
    %v196 = vsel %vm195, %v187, %v192
    %v197 = vrsqrt.pop %v186
    %v198 = vmul.f32 %v197, %v186
    %v199 = vmul.f32 %v198, %v197
    %v200 = vmul.f32 0.5, %v199
    %v201 = vsub.f32 1.5, %v200
    %v202 = vmul.f32 %v197, %v201
    %vm203 = vweird.f32 %v186
    %vm204 = vweird.f32 %v197
    %vm205 = vmor %vm203, %vm204
    %v206 = vsel %vm205, %v197, %v202
    %v207 = vmul.f32 %v183, %v196
    %v208 = vmul.f32 %v184, %v206
    %v209 = vperm.slane %v128, 1
    %v210 = vmul.f32 %v207, %v209
    %v211 = vmul.f32 %v208, %v209
    %v212 = vperm.slane %v128, 2
    %v213 = vadd.f32 %v210, %v212
    %v214 = vadd.f32 %v211, %v212
    %v215 = vmax.f32 %v213, 0.0
    %v216 = vmax.f32 %v214, 0.0
    %s217 = scalar_lea.vmem [#allocation2], 16
    %v218 = vld [vmem:[%s217] sm:$0xf]
    %v219 = vld [vmem:[%s217 + $0x4] sm:$0xf]
    %v220 = vld [vmem:[%s217 + $0x8] sm:$0xf]
    %v221 = vld [vmem:[%s217 + $0xc] sm:$0xf]
    %v222 = vpack.c.bf16 %v216, %v215
    %s223 = scalar_lea.vmem %s3, 8
    %v224 = vld [vmem:[%s223] sm:$0x7]
    %v225 = vperm.slane %v224, 0
    %v230 = vunpack.c.l.b16 %v218
    %v231 = vunpack.c.l.b16 %v219
    %v232 = vunpack.c.l.b16 %v220
    %v233 = vunpack.c.l.b16 %v221
    %v234 = vpack.c.b16 %v231, %v230
    %v235 = vpack.c.b16 %v233, %v232
    %v239 = vsel %vm63, %v222, 0
    %241 = vmatpush.bf16.msra.mxu0 0
    %242 = vmatpush.bf16.msra.mxu0 0
    %243 = vmatpush.bf16.msra.mxu0 0
    %244 = vmatpush.bf16.msra.mxu0 0
    %245 = vmatpush.bf16.msra.mxu0 0
    %246 = vmatpush.bf16.msra.mxu0 0
    %247 = vmatpush.bf16.msra.mxu0 %v235
    %248 = vmatpush.bf16.msra.mxu0 %v234
    %249 = vmatmul.bf16.gmra.mxu0 %v239
    %v250 = vpop.f32.mrf.mxu0
    %v251 = vadd.f32 %v225, %v250
    %v252 = vpop.f32.mrf.mxu0
    %v253 = vadd.f32 %v225, %v252
    %254 = vdwg.mxu0
    %v255 = vsel %vm63, %v251, 0.0
    %256 = vadd.xlane.f32.xlu0 %v255
    %v257 = vpop.xlane.xlu0 %256
    %v258 = vsel %vm63, %v253, 0.0
    %259 = vadd.xlane.f32.xlu0 %v258
    %v260 = vpop.xlane.xlu0 %259
    %v261 = vmul.f32 %v251, %v251
    %v262 = vmul.f32 %v253, %v253
    %v263 = vsel %vm63, %v261, 0.0
    %264 = vadd.xlane.f32.xlu0 %v263
    %v265 = vpop.xlane.xlu0 %264
    %v266 = vsel %vm63, %v262, 0.0
    %267 = vadd.xlane.f32.xlu0 %v266
    %v268 = vpop.xlane.xlu0 %267
    %v269 = vmul.f32 %v257, 0.03125
    %v270 = vmul.f32 %v260, 0.03125
    %v271 = vmul.f32 %v265, 0.03125
    %v272 = vmul.f32 %v268, 0.03125
    %v273 = vmul.f32 %v269, %v269
    %v274 = vmul.f32 %v270, %v270
    %v275 = vsub.f32 %v271, %v273
    %v276 = vsub.f32 %v272, %v274
    %v277 = vmax.f32 %v275, 0.0
    %v278 = vmax.f32 %v276, 0.0
    %v279 = vsub.f32 %v251, %v269
    %v280 = vsub.f32 %v253, %v270
    %v281 = vadd.f32 %v277, 1e-05
    %v282 = vadd.f32 %v278, 1e-05
    %v283 = vrsqrt.pop %v281
    %v284 = vmul.f32 %v283, %v281
    %v285 = vmul.f32 %v284, %v283
    %v286 = vmul.f32 0.5, %v285
    %v287 = vsub.f32 1.5, %v286
    %v288 = vmul.f32 %v283, %v287
    %vm289 = vweird.f32 %v281
    %vm290 = vweird.f32 %v283
    %vm291 = vmor %vm289, %vm290
    %v292 = vsel %vm291, %v283, %v288
    %v293 = vrsqrt.pop %v282
    %v294 = vmul.f32 %v293, %v282
    %v295 = vmul.f32 %v294, %v293
    %v296 = vmul.f32 0.5, %v295
    %v297 = vsub.f32 1.5, %v296
    %v298 = vmul.f32 %v293, %v297
    %vm299 = vweird.f32 %v282
    %vm300 = vweird.f32 %v293
    %vm301 = vmor %vm299, %vm300
    %v302 = vsel %vm301, %v293, %v298
    %v303 = vmul.f32 %v279, %v292
    %v304 = vmul.f32 %v280, %v302
    %v305 = vperm.slane %v224, 1
    %v306 = vmul.f32 %v303, %v305
    %v307 = vmul.f32 %v304, %v305
    %v308 = vperm.slane %v224, 2
    %v309 = vadd.f32 %v306, %v308
    %v310 = vadd.f32 %v307, %v308
    %v311 = vmax.f32 %v309, 0.0
    %v312 = vmax.f32 %v310, 0.0
    %313 = vst.msk [vmem:[#allocation5] sm:$0xff] %vm63, %v311
    %314 = vst.msk [vmem:[#allocation5 + $0x8] sm:$0xff] %vm63, %v312
    // Predicated region
    $region22: #{tpu_custom_call.1} parent=1 // pred_check
      _
    $region23: #{tpu_custom_call.1} parent=1 // pred_check_branch
      %316 = sbr.rel (0) target = $region25
    $region24: #{tpu_custom_call.1} parent=1 // pred_region
      %318 = vsyncadd [#allocation4], 0
      %s319 = sshll.u32 [#allocation5], 4
      %s320 = int_to_ptr.vmem [resolvable:$true] %s319
      %s321 = sshll.u32 %s4, 4
      %s322 = int_to_ptr.hbm [resolvable:$true] %s321
      %327 = dma.vmem_to_hbm [thread:$0]  %s320, 256, %s322, [#allocation4], 128, 128, 8
    $region25: #{tpu_custom_call.1} parent=1 // pred_fallthru
      _
    // Predicated region
    $region26: #{tpu_custom_call.1} parent=1 // pred_check
      _
    $region27: #{tpu_custom_call.1} parent=1 // pred_check_branch
      %329 = sbr.rel (0) target = $region29
    $region28: #{tpu_custom_call.1} parent=1 // pred_region
      %331 = dma.done [#allocation4], 256
    $region29: #{tpu_custom_call.1} parent=1 // pred_fallthru
      _
    %332 = vsyncpa [#allocation3], 1
    %333 = vsyncpa [#allocation4], 1

</llo_original>
